<compile_context>
chip_gen: v7x
topology: tpu7x:2x2x1
jax: 0.10.0
libtpu: 0.0.40
codegen_flags: <defaults>
</compile_context>

<pallas_src>
import functools

import jax
import jax.numpy as jnp
from jax.experimental import pallas as pl
from jax.experimental.pallas import tpu as pltpu


def mha_kernel(x_ref, wq_ref, wk_ref, wv_ref, wp_ref, bp_ref, o_ref, acc_ref):
    """Grid = (batch_blocks, num_heads). One head of one batch block per step."""
    h = pl.program_id(1)
    nh = pl.num_programs(1)

    @pl.when(h == 0)
    def _init():
        acc_ref[...] = jnp.zeros_like(acc_ref)

    xb = x_ref[...].astype(jnp.bfloat16)                       # (Bb, T, C)

    # Per-head projections; scale 1/sqrt(H) already folded into Wq (wrapper).
    # K = C feeds the MXU; head selection happened in the BlockSpec index_map.
    q = jnp.einsum('btc,cd->btd', xb, wq_ref[0],
                   preferred_element_type=jnp.float32)          # (Bb, T, H)
    k = jnp.einsum('btc,cd->btd', xb, wk_ref[0],
                   preferred_element_type=jnp.float32)
    v = jnp.einsum('btc,cd->btd', xb, wv_ref[0],
                   preferred_element_type=jnp.float32)

    # Scores + softmax in f32 (the -1e30 mask constant is only safe in f32).
    s = jnp.einsum('bqd,bkd->bqk', q.astype(jnp.bfloat16), k.astype(jnp.bfloat16),
                   preferred_element_type=jnp.float32)          # (Bb, T, T)
    T = s.shape[-1]
    row = jax.lax.broadcasted_iota(jnp.int32, (T, T), 0)
    col = jax.lax.broadcasted_iota(jnp.int32, (T, T), 1)
    s = jnp.where((row >= col)[None, :, :], s, jnp.float32(-1e30))

    m = jnp.max(s, axis=-1, keepdims=True)
    p = jnp.exp(s - m)
    denom = jnp.sum(p, axis=-1, keepdims=True)                  # (Bb, T, 1)

    attn = jnp.einsum('bqk,bkd->bqd', p.astype(jnp.bfloat16), v.astype(jnp.bfloat16),
                      preferred_element_type=jnp.float32)       # (Bb, T, H)
    # Normalize the small (T,H) output rather than the (T,T) probs; reciprocal
    # goes to the EUP slot, the broadcast-mul is T/H x cheaper VALU work.
    attn = attn * pl.reciprocal(denom, approx=True)

    # Head merge folded into Wp's row grouping: accumulate this head's
    # contribution to the projection output.
    acc_ref[...] += jnp.einsum('btd,dc->btc', attn.astype(jnp.bfloat16), wp_ref[0],
                               preferred_element_type=jnp.float32)

    @pl.when(h == nh - 1)
    def _finalize():
        o_ref[...] = (acc_ref[...] + bp_ref[...]).astype(o_ref.dtype)


def _live_vmem_bytes(bb, T, C, H, x_itemsize, out_itemsize):
    """Per-grid-step VMEM live set for a batch block of size bb (one head)."""
    io = 2 * bb * T * C * (x_itemsize + out_itemsize)   # double-buffered in/out tiles
    acc = bb * T * C * 4                                # f32 accumulator scratch
    xcast = bb * T * C * 2                              # bf16 copy of x
    qkv = 3 * bb * T * H * (4 + 2)                      # q/k/v f32 + bf16 copies
    scores = bb * T * T * (4 + 4 + 2)                   # s f32, p f32, p bf16
    attn = bb * T * H * (4 + 2)
    partial = bb * T * C * 4                            # per-head proj contribution
    weights = 2 * (3 * C * H + H * C) * 2 + C * 4       # double-buffered bf16 weights + bias
    return io + acc + xcast + qkv + scores + attn + partial + weights


def multi_head_attention(x, params, *, num_heads, block_b=None):
    B, T, C = x.shape
    assert C % num_heads == 0
    H = C // num_heads
    wq, wk, wv, wp, bp = params

    # --- head-major weight layout, built ONCE in the wrapper (free) ----------
    scale = jnp.float32(H ** -0.5)
    def split_cols(w):                      # (C, C) -> (NH, C, H)
        return w.reshape(C, num_heads, H).transpose(1, 0, 2)
    wq_hm = split_cols(wq.astype(jnp.float32) * scale).astype(jnp.bfloat16)
    wk_hm = split_cols(wk).astype(jnp.bfloat16)
    wv_hm = split_cols(wv).astype(jnp.bfloat16)
    wp_hm = wp.reshape(num_heads, H, C).astype(jnp.bfloat16)    # rows grouped by head
    bp_f = bp.astype(jnp.float32).reshape(1, C)

    x_itemsize = jnp.dtype(x.dtype).itemsize
    out_dtype = x.dtype
    out_itemsize = jnp.dtype(out_dtype).itemsize

    # --- generation-aware VMEM budget + block_b selection ---------------------
    try:
        vmem_cap = int(pltpu.get_tpu_info().vmem_capacity_bytes)
    except Exception:
        vmem_cap = 64 * 1024 * 1024          # conservative (v7x per-core size)
    vmem_limit = (vmem_cap * 3) // 4         # ~48 MiB on v7x, ~96 MiB on v5e/v6e
    budget = (vmem_cap * 3) // 5             # headroom for compiler scratch/spills

    if block_b is None:
        # >=2 batch grid steps so both v7x TensorCores get work (harmless on 1-TC chips).
        max_bb = max(1, B // 2) if B >= 2 else 1
        block_b = 1
        for bb in range(1, max_bb + 1):
            if _live_vmem_bytes(bb, T, C, H, x_itemsize, out_itemsize) <= budget:
                block_b = bb
    block_b = max(1, min(block_b, B))

    # Non-divisor batch sizes: zero-pad the batch dim (rows are independent).
    grid_b = -(-B // block_b)
    Bpad = grid_b * block_b
    if Bpad != B:
        x = jnp.pad(x, ((0, Bpad - B), (0, 0), (0, 0)))

    # Advisory cost estimate for the XLA scheduler.
    flops = int(B * (8 * T * C * C + 4 * T * T * C))
    transcendentals = int(B * num_heads * T * T)
    weight_bytes = (wq_hm.size + wk_hm.size + wv_hm.size + wp_hm.size) * 2 + bp_f.size * 4
    bytes_accessed = int(B * T * C * (x_itemsize + out_itemsize) + grid_b * weight_bytes)

    out = pl.pallas_call(
        mha_kernel,
        out_shape=jax.ShapeDtypeStruct((Bpad, T, C), out_dtype),
        grid_spec=pltpu.PrefetchScalarGridSpec(
            num_scalar_prefetch=0,
            grid=(grid_b, num_heads),                    # reduction (head) axis last
            in_specs=[
                pl.BlockSpec((block_b, T, C), lambda b, h: (b, 0, 0)),   # x (resident across h)
                pl.BlockSpec((1, C, H), lambda b, h: (h, 0, 0)),         # Wq head slice
                pl.BlockSpec((1, C, H), lambda b, h: (h, 0, 0)),         # Wk head slice
                pl.BlockSpec((1, C, H), lambda b, h: (h, 0, 0)),         # Wv head slice
                pl.BlockSpec((1, H, C), lambda b, h: (h, 0, 0)),         # Wp head rows
                pl.BlockSpec((1, C), lambda b, h: (0, 0)),               # bias (tiny, constant)
            ],
            out_specs=pl.BlockSpec((block_b, T, C), lambda b, h: (b, 0, 0)),
            scratch_shapes=[pltpu.VMEM((block_b, T, C), jnp.float32)],   # f32 accumulator
        ),
        compiler_params=pltpu.CompilerParams(
            dimension_semantics=("parallel", "arbitrary"),
            vmem_limit_bytes=int(vmem_limit)),
        cost_estimate=pl.CostEstimate(
            flops=flops,
            transcendentals=transcendentals,
            bytes_accessed=bytes_accessed),
    )(x, wq_hm, wk_hm, wv_hm, wp_hm, bp_f)

    return out[:B] if Bpad != B else out


def multi_head_attention_ref(x, params, *, num_heads):
    """Pure-JAX f32 reference matching the PyTorch forward semantics."""
    wq, wk, wv, wp, bp = params
    B, T, C = x.shape
    H = C // num_heads
    scale = H ** -0.5
    causal = jnp.tril(jnp.ones((T, T), dtype=bool))

    heads = []
    for h in range(num_heads):
        sl = slice(h * H, (h + 1) * H)
        q = x @ wq[:, sl]
        k = x @ wk[:, sl]
        v = x @ wv[:, sl]
        s = (q @ jnp.swapaxes(k, -2, -1)) * scale
        s = jnp.where(causal, s, -jnp.inf)
        p = jax.nn.softmax(s, axis=-1)
        heads.append(p @ v)
    sa = jnp.concatenate(heads, axis=-1)
    return sa @ wp + bp[0]


def init_params(key, embedding_dim, num_heads):
    C = embedding_dim
    ks = jax.random.split(key, 5)
    scale = 0.1
    wq = scale * jax.random.normal(ks[0], (C, C), jnp.float32)
    wk = scale * jax.random.normal(ks[1], (C, C), jnp.float32)
    wv = scale * jax.random.normal(ks[2], (C, C), jnp.float32)
    wp = scale * jax.random.normal(ks[3], (C, C), jnp.float32)
    bp = scale * jax.random.normal(ks[4], (1, C), jnp.float32)
    return (wq, wk, wv, wp, bp)


if __name__ == "__main__":
    B, T, C = 2, 8, 32        # batch, context_length, embedding_dim
    num_heads = 4             # head_size = C // num_heads = 8

    key = jax.random.PRNGKey(0)
    kx, kp = jax.random.split(key)
    x = jax.random.normal(kx, (B, T, C), jnp.float32)
    params = init_params(kp, C, num_heads)

    out = multi_head_attention(x, params, num_heads=num_heads)
    out = jax.block_until_ready(out)

    ref = multi_head_attention_ref(x, params, num_heads=num_heads)
    assert out.shape == (B, T, C)
    # bf16 matmuls + approx reciprocal -> loosened tolerance vs f32 reference
    assert jnp.allclose(out, ref, rtol=2e-2, atol=2e-2), "mismatch vs JAX reference"

    print("KERNEL_OK")
</pallas_src>

<mosaic_0001>
module attributes {stable_mosaic.version = 11 : i64} {
  func.func @mha_kernel(%arg0: i32, %arg1: i32, %arg2: memref<1x8x32xf32, #tpu.memory_space<vmem>>, %arg3: memref<1x32x8xbf16, #tpu.memory_space<vmem>>, %arg4: memref<1x32x8xbf16, #tpu.memory_space<vmem>>, %arg5: memref<1x32x8xbf16, #tpu.memory_space<vmem>>, %arg6: memref<1x8x32xbf16, #tpu.memory_space<vmem>>, %arg7: memref<1x32xf32, #tpu.memory_space<vmem>>, %arg8: memref<1x8x32xf32, #tpu.memory_space<vmem>>, %arg9: memref<1x8x32xf32, #tpu.memory_space<vmem>>) attributes {dimension_semantics = [#tpu.dimension_semantics<parallel>, #tpu.dimension_semantics<arbitrary>], iteration_bounds = array<i64: 2, 4>, scalar_prefetch = 0 : i64, scratch_operands = 1 : i64, tpu.core_type = #tpu.core_type<tc>, window_params = [{transform_indices = @transform_0, window_bounds = array<i64: 1, 8, 32>}, {transform_indices = @transform_1, window_bounds = array<i64: 1, 32, 8>}, {transform_indices = @transform_2, window_bounds = array<i64: 1, 32, 8>}, {transform_indices = @transform_3, window_bounds = array<i64: 1, 32, 8>}, {transform_indices = @transform_4, window_bounds = array<i64: 1, 8, 32>}, {pipeline_mode = #tpu.pipeline_mode<synchronous>, transform_indices = @transform_5, window_bounds = array<i64: 1, 32>}, {transform_indices = @transform_6, window_bounds = array<i64: 1, 8, 32>}]} {
    %c0_i32 = arith.constant 0 : i32
    %0 = arith.cmpi eq, %arg1, %c0_i32 : i32
    %1 = arith.extui %0 : i1 to i32
    %c0_i32_0 = arith.constant 0 : i32
    %2 = arith.cmpi ne, %1, %c0_i32_0 : i32
    scf.if %2 {
      %cst_30 = arith.constant 0.000000e+00 : f32
      %46 = vector.broadcast %cst_30 : f32 to vector<1x8x32xf32>
      %c0_31 = arith.constant 0 : index
      %c0_32 = arith.constant 0 : index
      %c0_33 = arith.constant 0 : index
      %47 = vector.load %arg9[%c0_31, %c0_32, %c0_33] : memref<1x8x32xf32, #tpu.memory_space<vmem>>, vector<1x8x32xf32>
      tpu.vector_store %arg9[%c0_31, %c0_32, %c0_33], %46 {strides = array<i32>} : memref<1x8x32xf32, #tpu.memory_space<vmem>>, vector<1x8x32xf32>,
    } else {
    }
    %c0 = arith.constant 0 : index
    %c0_1 = arith.constant 0 : index
    %c0_2 = arith.constant 0 : index
    %3 = vector.load %arg2[%c0, %c0_1, %c0_2] : memref<1x8x32xf32, #tpu.memory_space<vmem>>, vector<1x8x32xf32>
    %4 = arith.truncf %3 : vector<1x8x32xf32> to vector<1x8x32xbf16>
    %c0_3 = arith.constant 0 : index
    %c0_4 = arith.constant 0 : index
    %c0_5 = arith.constant 0 : index
    %5 = vector.load %arg3[%c0_3, %c0_4, %c0_5] : memref<1x32x8xbf16, #tpu.memory_space<vmem>>, vector<1x32x8xbf16>
    %6 = vector.shape_cast %5 : vector<1x32x8xbf16> to vector<32x8xbf16>
    "tpu.trace_start"() <{level = 10 : i32, message = "btc,cd->btd"}> : () -> ()
    %cst = arith.constant dense<0.000000e+00> : vector<1x8x8xf32>
    %7 = tpu.matmul %4, %6, %cst {dimension_numbers = #tpu.dot_dimension_numbers<[2], [0], [0, 1], [1], [0, 0, 0, 1, 1, 1], [], []>} : vector<1x8x32xbf16>, vector<32x8xbf16>, vector<1x8x8xf32> -> vector<1x8x8xf32>
    "tpu.trace_stop"() : () -> ()
    %c0_6 = arith.constant 0 : index
    %c0_7 = arith.constant 0 : index
    %c0_8 = arith.constant 0 : index
    %8 = vector.load %arg4[%c0_6, %c0_7, %c0_8] : memref<1x32x8xbf16, #tpu.memory_space<vmem>>, vector<1x32x8xbf16>
    %9 = vector.shape_cast %8 : vector<1x32x8xbf16> to vector<32x8xbf16>
    "tpu.trace_start"() <{level = 10 : i32, message = "btc,cd->btd"}> : () -> ()
    %cst_9 = arith.constant dense<0.000000e+00> : vector<1x8x8xf32>
    %10 = tpu.matmul %4, %9, %cst_9 {dimension_numbers = #tpu.dot_dimension_numbers<[2], [0], [0, 1], [1], [0, 0, 0, 1, 1, 1], [], []>} : vector<1x8x32xbf16>, vector<32x8xbf16>, vector<1x8x8xf32> -> vector<1x8x8xf32>
    "tpu.trace_stop"() : () -> ()
    %c0_10 = arith.constant 0 : index
    %c0_11 = arith.constant 0 : index
    %c0_12 = arith.constant 0 : index
    %11 = vector.load %arg5[%c0_10, %c0_11, %c0_12] : memref<1x32x8xbf16, #tpu.memory_space<vmem>>, vector<1x32x8xbf16>
    %12 = vector.shape_cast %11 : vector<1x32x8xbf16> to vector<32x8xbf16>
    "tpu.trace_start"() <{level = 10 : i32, message = "btc,cd->btd"}> : () -> ()
    %cst_13 = arith.constant dense<0.000000e+00> : vector<1x8x8xf32>
    %13 = tpu.matmul %4, %12, %cst_13 {dimension_numbers = #tpu.dot_dimension_numbers<[2], [0], [0, 1], [1], [0, 0, 0, 1, 1, 1], [], []>} : vector<1x8x32xbf16>, vector<32x8xbf16>, vector<1x8x8xf32> -> vector<1x8x8xf32>
    "tpu.trace_stop"() : () -> ()
    %14 = arith.truncf %7 : vector<1x8x8xf32> to vector<1x8x8xbf16>
    %15 = arith.truncf %10 : vector<1x8x8xf32> to vector<1x8x8xbf16>
    "tpu.trace_start"() <{level = 10 : i32, message = "bqd,bkd->bqk"}> : () -> ()
    %cst_14 = arith.constant dense<0.000000e+00> : vector<1x8x8xf32>
    %16 = tpu.matmul %14, %15, %cst_14 {dimension_numbers = #tpu.dot_dimension_numbers<[2], [2], [1], [1], [0, 0, 0, 1, 1, 1], [0], [0]>} : vector<1x8x8xbf16>, vector<1x8x8xbf16>, vector<1x8x8xf32> -> vector<1x8x8xf32>
    "tpu.trace_stop"() : () -> ()
    %17 = tpu.iota {dimensions = array<i32: 0>} : vector<8x8xi32>
    %18 = tpu.iota {dimensions = array<i32: 1>} : vector<8x8xi32>
    %19 = arith.cmpi sge, %17, %18 : vector<8x8xi32>
    %20 = vector.shape_cast %19 : vector<8x8xi1> to vector<1x8x8xi1>
    %cst_15 = arith.constant -1.000000e+30 : f32
    %21 = vector.broadcast %cst_15 : f32 to vector<1x8x8xf32>
    %22 = arith.select %20, %16, %21 : vector<1x8x8xi1>, vector<1x8x8xf32>
    %cst_16 = arith.constant dense<0xFF800000> : vector<1x8xf32>
    %23 = vector.multi_reduction <maximumf>, %22, %cst_16 [2] : vector<1x8x8xf32> to vector<1x8xf32>
    %24 = vector.shape_cast %23 : vector<1x8xf32> to vector<1x8x1xf32>
    %25 = vector.broadcast %24 : vector<1x8x1xf32> to vector<1x8x8xf32>
    %26 = arith.subf %22, %25 : vector<1x8x8xf32>
    %27 = math.exp %26 : vector<1x8x8xf32>
    %cst_17 = arith.constant dense<0.000000e+00> : vector<1x8xf32>
    %28 = vector.multi_reduction <add>, %27, %cst_17 [2] : vector<1x8x8xf32> to vector<1x8xf32>
    %29 = vector.shape_cast %28 : vector<1x8xf32> to vector<1x8x1xf32>
    %30 = arith.truncf %27 : vector<1x8x8xf32> to vector<1x8x8xbf16>
    %31 = arith.truncf %13 : vector<1x8x8xf32> to vector<1x8x8xbf16>
    "tpu.trace_start"() <{level = 10 : i32, message = "bqk,bkd->bqd"}> : () -> ()
    %cst_18 = arith.constant dense<0.000000e+00> : vector<1x8x8xf32>
    %32 = tpu.matmul %30, %31, %cst_18 {dimension_numbers = #tpu.dot_dimension_numbers<[2], [1], [1], [2], [0, 0, 0, 1, 1, 2], [0], [0]>} : vector<1x8x8xbf16>, vector<1x8x8xbf16>, vector<1x8x8xf32> -> vector<1x8x8xf32>
    "tpu.trace_stop"() : () -> ()
    %33 = tpu.reciprocal %29 {approx = true} : vector<1x8x1xf32> -> vector<1x8x1xf32>
    %34 = vector.broadcast %33 : vector<1x8x1xf32> to vector<1x8x8xf32>
    %35 = arith.mulf %32, %34 : vector<1x8x8xf32>
    %c0_19 = arith.constant 0 : index
    %c0_20 = arith.constant 0 : index
    %c0_21 = arith.constant 0 : index
    %36 = vector.load %arg9[%c0_19, %c0_20, %c0_21] : memref<1x8x32xf32, #tpu.memory_space<vmem>>, vector<1x8x32xf32>
    %37 = arith.truncf %35 : vector<1x8x8xf32> to vector<1x8x8xbf16>
    %c0_22 = arith.constant 0 : index
    %c0_23 = arith.constant 0 : index
    %c0_24 = arith.constant 0 : index
    %38 = vector.load %arg6[%c0_22, %c0_23, %c0_24] : memref<1x8x32xbf16, #tpu.memory_space<vmem>>, vector<1x8x32xbf16>
    %39 = vector.shape_cast %38 : vector<1x8x32xbf16> to vector<8x32xbf16>
    "tpu.trace_start"() <{level = 10 : i32, message = "btd,dc->btc"}> : () -> ()
    %cst_25 = arith.constant dense<0.000000e+00> : vector<1x8x32xf32>
    %40 = tpu.matmul %37, %39, %cst_25 {dimension_numbers = #tpu.dot_dimension_numbers<[2], [0], [0, 1], [1], [0, 0, 0, 1, 1, 1], [], []>} : vector<1x8x8xbf16>, vector<8x32xbf16>, vector<1x8x32xf32> -> vector<1x8x32xf32>
    "tpu.trace_stop"() : () -> ()
    %41 = arith.addf %36, %40 : vector<1x8x32xf32>
    %c0_26 = arith.constant 0 : index
    %c0_27 = arith.constant 0 : index
    %c0_28 = arith.constant 0 : index
    %42 = vector.load %arg9[%c0_26, %c0_27, %c0_28] : memref<1x8x32xf32, #tpu.memory_space<vmem>>, vector<1x8x32xf32>
    tpu.vector_store %arg9[%c0_26, %c0_27, %c0_28], %41 {strides = array<i32>} : memref<1x8x32xf32, #tpu.memory_space<vmem>>, vector<1x8x32xf32>,
    %c3_i32 = arith.constant 3 : i32
    %43 = arith.cmpi eq, %arg1, %c3_i32 : i32
    %44 = arith.extui %43 : i1 to i32
    %c0_i32_29 = arith.constant 0 : i32
    %45 = arith.cmpi ne, %44, %c0_i32_29 : i32
    scf.if %45 {
      %c0_30 = arith.constant 0 : index
      %c0_31 = arith.constant 0 : index
      %c0_32 = arith.constant 0 : index
      %46 = vector.load %arg9[%c0_30, %c0_31, %c0_32] : memref<1x8x32xf32, #tpu.memory_space<vmem>>, vector<1x8x32xf32>
      %c0_33 = arith.constant 0 : index
      %c0_34 = arith.constant 0 : index
      %47 = vector.load %arg7[%c0_33, %c0_34] : memref<1x32xf32, #tpu.memory_space<vmem>>, vector<1x32xf32>
      %48 = vector.shape_cast %47 : vector<1x32xf32> to vector<1x1x32xf32>
      %49 = vector.broadcast %48 : vector<1x1x32xf32> to vector<1x8x32xf32>
      %50 = arith.addf %46, %49 : vector<1x8x32xf32>
      %c0_35 = arith.constant 0 : index
      %c0_36 = arith.constant 0 : index
      %c0_37 = arith.constant 0 : index
      %51 = vector.load %arg8[%c0_35, %c0_36, %c0_37] : memref<1x8x32xf32, #tpu.memory_space<vmem>>, vector<1x8x32xf32>
      tpu.vector_store %arg8[%c0_35, %c0_36, %c0_37], %50 {strides = array<i32>} : memref<1x8x32xf32, #tpu.memory_space<vmem>>, vector<1x8x32xf32>,
    } else {
    }
    return
  }
  func.func @transform_0(%arg0: i32, %arg1: i32) -> (i32, i32, i32) {
    %c0_i32 = arith.constant 0 : i32
    %c0_i32_0 = arith.constant 0 : i32
    %c0_i32_1 = arith.constant 0 : i32
    return %arg0, %c0_i32, %c0_i32_0 : i32, i32, i32
  }
  func.func @transform_1(%arg0: i32, %arg1: i32) -> (i32, i32, i32) {
    %c0_i32 = arith.constant 0 : i32
    %c0_i32_0 = arith.constant 0 : i32
    %c0_i32_1 = arith.constant 0 : i32
    return %arg1, %c0_i32, %c0_i32_0 : i32, i32, i32
  }
  func.func @transform_2(%arg0: i32, %arg1: i32) -> (i32, i32, i32) {
    %c0_i32 = arith.constant 0 : i32
    %c0_i32_0 = arith.constant 0 : i32
    %c0_i32_1 = arith.constant 0 : i32
    return %arg1, %c0_i32, %c0_i32_0 : i32, i32, i32
  }
  func.func @transform_3(%arg0: i32, %arg1: i32) -> (i32, i32, i32) {
    %c0_i32 = arith.constant 0 : i32
    %c0_i32_0 = arith.constant 0 : i32
    %c0_i32_1 = arith.constant 0 : i32
    return %arg1, %c0_i32, %c0_i32_0 : i32, i32, i32
  }
  func.func @transform_4(%arg0: i32, %arg1: i32) -> (i32, i32, i32) {
    %c0_i32 = arith.constant 0 : i32
    %c0_i32_0 = arith.constant 0 : i32
    %c0_i32_1 = arith.constant 0 : i32
    return %arg1, %c0_i32, %c0_i32_0 : i32, i32, i32
  }
  func.func @transform_5(%arg0: i32, %arg1: i32) -> (i32, i32) {
    %c0_i32 = arith.constant 0 : i32
    %c0_i32_0 = arith.constant 0 : i32
    %c0_i32_1 = arith.constant 0 : i32
    return %c0_i32, %c0_i32_0 : i32, i32
  }
  func.func @transform_6(%arg0: i32, %arg1: i32) -> (i32, i32, i32) {
    %c0_i32 = arith.constant 0 : i32
    %c0_i32_0 = arith.constant 0 : i32
    %c0_i32_1 = arith.constant 0 : i32
    return %arg0, %c0_i32, %c0_i32_0 : i32, i32, i32
  }
}

</mosaic_0001>

<llo_original>
// kernel: tpu_custom_call.1
$region0: #{tpu_custom_call.1}
  #allocation0 [shape = 'u32[]', space=smem, size = 0x4, offset = 0x4, fixed_abs, tag = 'smem constant byte address 0x4 - core index']
  #allocation1 [shape = 'u32[144,128]{1,0:T(1,128)}', space=vmem, size = 0x12000, scoped, tag = 'internal scratch']
  #allocation2 [shape = 'f32[1,8,32]{2,1,0:T(8,128)}', space=vmem, size = 0x1000, scoped, tag = 'scratch operand']
  %s0 = inlined_call_operand.vmem [shape: f32[2,8,32], index: 0, kind: input, shape index: {}]
  %s1 = inlined_call_operand.vmem [shape: bf16[4,32,8], index: 1, kind: input, shape index: {}]
  %s2 = inlined_call_operand.vmem [shape: bf16[4,32,8], index: 2, kind: input, shape index: {}]
  %s3 = inlined_call_operand.vmem [shape: bf16[4,32,8], index: 3, kind: input, shape index: {}]
  %s4 = inlined_call_operand.vmem [shape: bf16[4,8,32], index: 4, kind: input, shape index: {}]
  %s5 = inlined_call_operand.vmem [shape: f32[1,32], index: 5, kind: input, shape index: {}]
  %s6 = inlined_call_operand.hbm [shape: f32[2,8,32], index: 6, kind: output, shape index: {}]
  %s7 = sld [smem:[#allocation0]]
  $region65: #{tpu_custom_call.1} parent=0
    _
  %s9 = ssub.s32 1, %s7
  %s10 = scalar_select 0, %s9, %s7
  $region1: #{tpu_custom_call.1} parent=0
    #allocation3 [shape = 'u8[8192]{0}', space=vmem, size = 0x2000, scoped, tag = 'output window, operand 0']
    #allocation4 [shape = 's32[2]{0}', space=sflag, size = 0x8, scoped, tag = 'scoped memory for tpu_custom_call.1']
    %11 = vsyncpa [#allocation4], 0
    %s12 = scalar_lea.sflag [#allocation4], 1
    %13 = vsyncpa %s12, 0
    loop: start=0, step=1, limit=10
    $region2: #{tpu_custom_call.1} parent=1 // loop_pre_header
      _
    $region3: #{tpu_custom_call.1} parent=1 // loop_header
      %s15 = sphi 0, %s19
      %p16 = scmp.ge.s32.totalorder %s15, 10
      %s22 = sphi 0, %s34
      %s23 = sphi 0, %s30
      %s24 = sphi 0, %s22
      %s25 = sphi 0, %s23
      %s26 = sphi 0, %s24
      %s27 = sphi 0, %s25
      %s37 = sphi 0, %s39
      %s40 = sphi 0, %s37
      %s41 = sphi 0, %s40
      %s57 = sphi 0, %s41
      %s63 = sphi 0, %s65
      %s66 = sphi 0, %s63
      %s67 = sphi 0, %s66
      %s83 = sphi 0, %s67
      %s89 = sphi 0, %s91
      %s92 = sphi 0, %s89
      %s93 = sphi 0, %s92
      %s109 = sphi 0, %s93
      %s115 = sphi 0, %s117
      %s118 = sphi 0, %s115
      %s119 = sphi 0, %s118
      %s135 = sphi 0, %s119
      %s141 = sphi 0, %s143
      %s144 = sphi 0, %s141
      %s145 = sphi 0, %s144
      %s161 = sphi 0, %s145
      %s165 = sphi 0, %s165
      %s167 = sphi 0, %s165
      %s168 = sphi 0, %s167
      %s182 = sphi 0, %s168
      %s188 = sphi 0, %s190
      %s191 = sphi 0, %s188
      %s192 = sphi 0, %s191
      %s208 = sphi 0, %s192
    $region4: #{tpu_custom_call.1} parent=1 // loop_header_branch
      %18 = sbr.rel (%p16) target = $region8
    $region5: #{tpu_custom_call.1} parent=1 // loop_body
      %s20 = ssub.s32 %s15, 1
      %s21 = ssub.s32 %s15, 2
      %s28 = sadd.s32 1, %s23
      %p29 = scmp.ge.s32.totalorder %s28, 4
      %s30 = scalar_select %p29, 0, %s28
      %s31 = sadd.s32 1, %s22
      %s32 = scalar_select %p29, %s31, %s22
      %p33 = scmp.ge.s32.totalorder %s32, 2
      %s34 = scalar_select %p33, 0, %s32
      %s35 = ssub.s32 %s22, %s34
      %p36 = scmp.eq.s32.totalorder %s35, 0
      %s38 = sadd.s32 %s37, 1
      %s39 = scalar_select %p36, %s37, %s38
      %p42 = pneg %p36
      %p43 = scmp.eq.s32.totalorder %s15, 7
      %p44 = por %p42, %p43
      %p45 = scmp.ne.s32.totalorder %s37, %s40
      %p46 = scmp.eq.s32.totalorder %s15, 0
      %p47 = por %p45, %p46
      %p48 = scmp.ne.s32.totalorder %s37, %s40
      %p49 = scmp.eq.s32.totalorder %s20, 7
      %p50 = por %p48, %p49
      %p51 = scmp.ne.s32.totalorder %s40, %s41
      %p52 = scmp.eq.s32.totalorder %s20, 0
      %p53 = por %p51, %p52
      %p54 = scmp.ne.s32.totalorder %s40, %s41
      %p55 = scmp.eq.s32.totalorder %s21, 7
      %p56 = por %p54, %p55
      %p58 = scmp.ne.s32.totalorder %s41, %s57
      %p59 = scmp.eq.s32.totalorder %s21, 0
      %p60 = por %p58, %p59
      %s61 = ssub.s32 %s23, %s30
      %p62 = scmp.eq.s32.totalorder %s61, 0
      %s64 = sadd.s32 %s63, 1
      %s65 = scalar_select %p62, %s63, %s64
      %p68 = pneg %p62
      %p69 = scmp.eq.s32.totalorder %s15, 7
      %p70 = por %p68, %p69
      %p71 = scmp.ne.s32.totalorder %s63, %s66
      %p72 = scmp.eq.s32.totalorder %s15, 0
      %p73 = por %p71, %p72
      %p74 = scmp.ne.s32.totalorder %s63, %s66
      %p75 = scmp.eq.s32.totalorder %s20, 7
      %p76 = por %p74, %p75
      %p77 = scmp.ne.s32.totalorder %s66, %s67
      %p78 = scmp.eq.s32.totalorder %s20, 0
      %p79 = por %p77, %p78
      %p80 = scmp.ne.s32.totalorder %s66, %s67
      %p81 = scmp.eq.s32.totalorder %s21, 7
      %p82 = por %p80, %p81
      %p84 = scmp.ne.s32.totalorder %s67, %s83
      %p85 = scmp.eq.s32.totalorder %s21, 0
      %p86 = por %p84, %p85
      %s87 = ssub.s32 %s23, %s30
      %p88 = scmp.eq.s32.totalorder %s87, 0
      %s90 = sadd.s32 %s89, 1
      %s91 = scalar_select %p88, %s89, %s90
      %p94 = pneg %p88
      %p95 = scmp.eq.s32.totalorder %s15, 7
      %p96 = por %p94, %p95
      %p97 = scmp.ne.s32.totalorder %s89, %s92
      %p98 = scmp.eq.s32.totalorder %s15, 0
      %p99 = por %p97, %p98
      %p100 = scmp.ne.s32.totalorder %s89, %s92
      %p101 = scmp.eq.s32.totalorder %s20, 7
      %p102 = por %p100, %p101
      %p103 = scmp.ne.s32.totalorder %s92, %s93
      %p104 = scmp.eq.s32.totalorder %s20, 0
      %p105 = por %p103, %p104
      %p106 = scmp.ne.s32.totalorder %s92, %s93
      %p107 = scmp.eq.s32.totalorder %s21, 7
      %p108 = por %p106, %p107
      %p110 = scmp.ne.s32.totalorder %s93, %s109
      %p111 = scmp.eq.s32.totalorder %s21, 0
      %p112 = por %p110, %p111
      %s113 = ssub.s32 %s23, %s30
      %p114 = scmp.eq.s32.totalorder %s113, 0
      %s116 = sadd.s32 %s115, 1
      %s117 = scalar_select %p114, %s115, %s116
      %p120 = pneg %p114
      %p121 = scmp.eq.s32.totalorder %s15, 7
      %p122 = por %p120, %p121
      %p123 = scmp.ne.s32.totalorder %s115, %s118
      %p124 = scmp.eq.s32.totalorder %s15, 0
      %p125 = por %p123, %p124
      %p126 = scmp.ne.s32.totalorder %s115, %s118
      %p127 = scmp.eq.s32.totalorder %s20, 7
      %p128 = por %p126, %p127
      %p129 = scmp.ne.s32.totalorder %s118, %s119
      %p130 = scmp.eq.s32.totalorder %s20, 0
      %p131 = por %p129, %p130
      %p132 = scmp.ne.s32.totalorder %s118, %s119
      %p133 = scmp.eq.s32.totalorder %s21, 7
      %p134 = por %p132, %p133
      %p136 = scmp.ne.s32.totalorder %s119, %s135
      %p137 = scmp.eq.s32.totalorder %s21, 0
      %p138 = por %p136, %p137
      %s139 = ssub.s32 %s23, %s30
      %p140 = scmp.eq.s32.totalorder %s139, 0
      %s142 = sadd.s32 %s141, 1
      %s143 = scalar_select %p140, %s141, %s142
      %p146 = pneg %p140
      %p147 = scmp.eq.s32.totalorder %s15, 7
      %p148 = por %p146, %p147
      %p149 = scmp.ne.s32.totalorder %s141, %s144
      %p150 = scmp.eq.s32.totalorder %s15, 0
      %p151 = por %p149, %p150
      %p152 = scmp.ne.s32.totalorder %s141, %s144
      %p153 = scmp.eq.s32.totalorder %s20, 7
      %p154 = por %p152, %p153
      %p155 = scmp.ne.s32.totalorder %s144, %s145
      %p156 = scmp.eq.s32.totalorder %s20, 0
      %p157 = por %p155, %p156
      %p158 = scmp.ne.s32.totalorder %s144, %s145
      %p159 = scmp.eq.s32.totalorder %s21, 7
      %p160 = por %p158, %p159
      %p162 = scmp.ne.s32.totalorder %s145, %s161
      %p163 = scmp.eq.s32.totalorder %s21, 0
      %p164 = por %p162, %p163
      %s166 = sadd.s32 %s165, 1
      %p169 = scmp.eq.s32.totalorder %s15, 7
      %p170 = scmp.ne.s32.totalorder %s165, %s167
      %p171 = scmp.eq.s32.totalorder %s15, 0
      %p172 = por %p170, %p171
      %p173 = scmp.ne.s32.totalorder %s165, %s167
      %p174 = scmp.eq.s32.totalorder %s20, 7
      %p175 = por %p173, %p174
      %p176 = scmp.ne.s32.totalorder %s167, %s168
      %p177 = scmp.eq.s32.totalorder %s20, 0
      %p178 = por %p176, %p177
      %p179 = scmp.ne.s32.totalorder %s167, %s168
      %p180 = scmp.eq.s32.totalorder %s21, 7
      %p181 = por %p179, %p180
      %p183 = scmp.ne.s32.totalorder %s168, %s182
      %p184 = scmp.eq.s32.totalorder %s21, 0
      %p185 = por %p183, %p184
      %s186 = ssub.s32 %s22, %s34
      %p187 = scmp.eq.s32.totalorder %s186, 0
      %s189 = sadd.s32 %s188, 1
      %s190 = scalar_select %p187, %s188, %s189
      %p193 = pneg %p187
      %p194 = scmp.eq.s32.totalorder %s15, 7
      %p195 = por %p193, %p194
      %p196 = scmp.ne.s32.totalorder %s188, %s191
      %p197 = scmp.eq.s32.totalorder %s15, 0
      %p198 = por %p196, %p197
      %p199 = scmp.ne.s32.totalorder %s188, %s191
      %p200 = scmp.eq.s32.totalorder %s20, 7
      %p201 = por %p199, %p200
      %p202 = scmp.ne.s32.totalorder %s191, %s192
      %p203 = scmp.eq.s32.totalorder %s20, 0
      %p204 = por %p202, %p203
      %p205 = scmp.ne.s32.totalorder %s191, %s192
      %p206 = scmp.eq.s32.totalorder %s21, 7
      %p207 = por %p205, %p206
      %p209 = scmp.ne.s32.totalorder %s192, %s208
      %p210 = scmp.eq.s32.totalorder %s21, 0
      %p211 = por %p209, %p210
      %p212 = scmp.le.s32.totalorder 1, %s15
      %p213 = scmp.lt.s32.totalorder %s15, 9
      %p214 = pnand %p212, %p213
      %p215 = pneg %p214
      // Predicated region
      $region9: #{tpu_custom_call.1} parent=5 // pred_check
        _
      $region10: #{tpu_custom_call.1} parent=5 // pred_check_branch
        %217 = sbr.rel (%p214) target = $region12
      $region11: #{tpu_custom_call.1} parent=5 // pred_region
        %s218 = ssub.s32 %s15, 1
        // Predicated region
        $region13: #{tpu_custom_call.1} parent=11 // pred_check
          %p219 = pneg %p178
        $region14: #{tpu_custom_call.1} parent=11 // pred_check_branch
          %221 = sbr.rel (%p219) target = $region16
        $region15: #{tpu_custom_call.1} parent=11 // pred_region
          _
        $region16: #{tpu_custom_call.1} parent=11 // pred_fallthru
          _
      $region12: #{tpu_custom_call.1} parent=5 // pred_fallthru
        _
      %p222 = scmp.lt.s32.totalorder %s15, 8
      // Predicated region
      $region17: #{tpu_custom_call.1} parent=5 // pred_check
        %p223 = pneg %p222
      $region18: #{tpu_custom_call.1} parent=5 // pred_check_branch
        %225 = sbr.rel (%p223) target = $region20
      $region19: #{tpu_custom_call.1} parent=5 // pred_region
        // Predicated region
        $region21: #{tpu_custom_call.1} parent=19 // pred_check
          %p226 = pneg %p47
        $region22: #{tpu_custom_call.1} parent=19 // pred_check_branch
          %228 = sbr.rel (%p226) target = $region24
        $region23: #{tpu_custom_call.1} parent=19 // pred_region
          %p229 = scmp.lt.s32.totalorder %s22, 1
          %s230 = scalar_select %p229, %s22, 1
          %s231 = smul.addr %s230, 8
          %s232 = scalar_lea.vmem %s0, %s231
        $region24: #{tpu_custom_call.1} parent=19 // pred_fallthru
          _
        // Predicated region
        $region25: #{tpu_custom_call.1} parent=19 // pred_check
          %p233 = pneg %p73
        $region26: #{tpu_custom_call.1} parent=19 // pred_check_branch
          %235 = sbr.rel (%p233) target = $region28
        $region27: #{tpu_custom_call.1} parent=19 // pred_region
          %p236 = scmp.lt.s32.totalorder %s23, 3
          %s237 = scalar_select %p236, %s23, 3
          %s238 = smul.addr %s237, 4
          %s239 = smul.addr %s238, 4
          %s240 = scalar_lea.vmem %s1, %s239
        $region28: #{tpu_custom_call.1} parent=19 // pred_fallthru
          _
        // Predicated region
        $region29: #{tpu_custom_call.1} parent=19 // pred_check
          %p241 = pneg %p99
        $region30: #{tpu_custom_call.1} parent=19 // pred_check_branch
          %243 = sbr.rel (%p241) target = $region32
        $region31: #{tpu_custom_call.1} parent=19 // pred_region
          %p244 = scmp.lt.s32.totalorder %s23, 3
          %s245 = scalar_select %p244, %s23, 3
          %s246 = smul.addr %s245, 4
          %s247 = smul.addr %s246, 4
          %s248 = scalar_lea.vmem %s2, %s247
        $region32: #{tpu_custom_call.1} parent=19 // pred_fallthru
          _
        // Predicated region
        $region33: #{tpu_custom_call.1} parent=19 // pred_check
          %p249 = pneg %p125
        $region34: #{tpu_custom_call.1} parent=19 // pred_check_branch
          %251 = sbr.rel (%p249) target = $region36
        $region35: #{tpu_custom_call.1} parent=19 // pred_region
          %p252 = scmp.lt.s32.totalorder %s23, 3
          %s253 = scalar_select %p252, %s23, 3
          %s254 = smul.addr %s253, 4
          %s255 = smul.addr %s254, 4
          %s256 = scalar_lea.vmem %s3, %s255
        $region36: #{tpu_custom_call.1} parent=19 // pred_fallthru
          _
        // Predicated region
        $region37: #{tpu_custom_call.1} parent=19 // pred_check
          %p257 = pneg %p151
        $region38: #{tpu_custom_call.1} parent=19 // pred_check_branch
          %259 = sbr.rel (%p257) target = $region40
        $region39: #{tpu_custom_call.1} parent=19 // pred_region
          %p260 = scmp.lt.s32.totalorder %s23, 3
          %s261 = scalar_select %p260, %s23, 3
          %s262 = smul.addr %s261, 4
          %s263 = scalar_lea.vmem %s4, %s262
        $region40: #{tpu_custom_call.1} parent=19 // pred_fallthru
          _
      $region20: #{tpu_custom_call.1} parent=5 // pred_fallthru
        _
      %p264 = scmp.le.s32.totalorder 1, %s15
      %p265 = scmp.lt.s32.totalorder %s15, 9
      %p266 = pnand %p264, %p265
      %p267 = pneg %p266
      // Predicated region
      $region41: #{tpu_custom_call.1} parent=5 // pred_check
        _
      $region42: #{tpu_custom_call.1} parent=5 // pred_check_branch
        %269 = sbr.rel (%p266) target = $region44
      $region43: #{tpu_custom_call.1} parent=5 // pred_region
        %s270 = ssub.s32 %s15, 1
        %p271 = scmp.lt.s32.totalorder %s24, 1
        %s272 = scalar_select %p271, %s24, 1
        %s273 = smul.addr %s272, 8
        %s274 = scalar_lea.vmem %s0, %s273
        %p275 = pneg %p53
        %p276 = pneg %p50
        %p277 = scmp.lt.s32.totalorder %s25, 3
        %s278 = scalar_select %p277, %s25, 3
        %s279 = smul.addr %s278, 4
        %s280 = smul.addr %s279, 4
        %s281 = scalar_lea.vmem %s1, %s280
        %p282 = pneg %p79
        %p283 = pneg %p76
        %p284 = scmp.lt.s32.totalorder %s25, 3
        %s285 = scalar_select %p284, %s25, 3
        %s286 = smul.addr %s285, 4
        %s287 = smul.addr %s286, 4
        %s288 = scalar_lea.vmem %s2, %s287
        %p289 = pneg %p105
        %p290 = pneg %p102
        %p291 = scmp.lt.s32.totalorder %s25, 3
        %s292 = scalar_select %p291, %s25, 3
        %s293 = smul.addr %s292, 4
        %s294 = smul.addr %s293, 4
        %s295 = scalar_lea.vmem %s3, %s294
        %p296 = pneg %p131
        %p297 = pneg %p128
        %p298 = scmp.lt.s32.totalorder %s25, 3
        %s299 = scalar_select %p298, %s25, 3
        %s300 = smul.addr %s299, 4
        %s301 = scalar_lea.vmem %s4, %s300
        %p302 = pneg %p157
        %p303 = pneg %p154
        %p304 = pneg %p178
        %p305 = pneg %p175
        %p306 = pneg %p204
        %p307 = pneg %p201
        %s308 = sand.u32 %s191, 1
        %s309 = scalar_lea.sflag [#allocation4], %s308
        %s310 = sand.u32 %s191, 1
        %s311 = smul.addr %s310, 8
        %s312 = scalar_lea.vmem [#allocation3], %s311
        %p313 = scmp.lt.s32.totalorder %s24, 1
        %s314 = scalar_select %p313, %s24, 1
        %s315 = smul.addr %s314, 8
        %s316 = scalar_lea.vmem %s0, %s315
        %p317 = scmp.lt.s32.totalorder %s25, 3
        %s318 = scalar_select %p317, %s25, 3
        %s319 = smul.addr %s318, 4
        %s320 = smul.addr %s319, 4
        %s321 = scalar_lea.vmem %s1, %s320
        %p322 = scmp.lt.s32.totalorder %s25, 3
        %s323 = scalar_select %p322, %s25, 3
        %s324 = smul.addr %s323, 4
        %s325 = smul.addr %s324, 4
        %s326 = scalar_lea.vmem %s2, %s325
        %p327 = scmp.lt.s32.totalorder %s25, 3
        %s328 = scalar_select %p327, %s25, 3
        %s329 = smul.addr %s328, 4
        %s330 = smul.addr %s329, 4
        %s331 = scalar_lea.vmem %s3, %s330
        %p332 = scmp.lt.s32.totalorder %s25, 3
        %s333 = scalar_select %p332, %s25, 3
        %s334 = smul.addr %s333, 4
        %s335 = scalar_lea.vmem %s4, %s334
        %p337 = scmp.eq.s32.totalorder %s25, 0
        // Predicated region
        $region45: #{tpu_custom_call.1} parent=43 // pred_check
          %p338 = pneg %p337
        $region46: #{tpu_custom_call.1} parent=43 // pred_check_branch
          %340 = sbr.rel (%p338) target = $region48
        $region47: #{tpu_custom_call.1} parent=43 // pred_region
          %vm341 = vcmask 261120
          %342 = vst.msk [vmem:[#allocation2] sm:$0xff] %vm341, 0.0
        $region48: #{tpu_custom_call.1} parent=43 // pred_fallthru
          _
        %v343 = vld [vmem:[%s316] sm:$0xff]
        %v344 = vpack.c.bf16 %v343, %v343
        %v345 = vld [vmem:[%s321] sm:$0xf]
        %v346 = vld [vmem:[%s321 + $0x4] sm:$0xf]
        %v347 = vld [vmem:[%s321 + $0x8] sm:$0xf]
        %v348 = vld [vmem:[%s321 + $0xc] sm:$0xf]
        %v353 = vunpack.c.l.b16 %v345
        %v354 = vunpack.c.l.b16 %v346
        %v355 = vunpack.c.l.b16 %v347
        %v356 = vunpack.c.l.b16 %v348
        %v357 = vpack.c.b16 %v354, %v353
        %v358 = vpack.c.b16 %v356, %v355
        %vm361 = vcmask 261120
        %v363 = vsel %vm361, %v344, 0
        %365 = vmatprep.subr.bf16.mxu0 0
        %366 = vmatpush1.bf16.msra.mxu0 %v357
        %367 = vmatprep.subr.bf16.mxu0 0
        %368 = vmatpush1.bf16.msra.mxu0 %v358
        %369 = vmatprep.subr.bf16.mxu0 0
        %370 = vmatpush1.bf16.msra.mxu0 0
        %371 = vmatprep.subr.bf16.mxu0 0
        %372 = vmatpush1.bf16.msra.mxu0 0
        %373 = vmatprep.subr.bf16.mxu0 0
        %374 = vmatpush1.bf16.msra.mxu0 0
        %375 = vmatprep.subr.bf16.mxu0 0
        %376 = vmatpush1.bf16.msra.mxu0 0
        %377 = vmatprep.subr.bf16.mxu0 0
        %378 = vmatpush1.bf16.msra.mxu0 0
        %379 = vmatprep.subr.bf16.mxu0 0
        %380 = vmatpush1.bf16.msra.mxu0 0
        %381 = vmatprep.subr.bf16.mxu0 0
        %382 = vmatpush1.bf16.msra.mxu0 0
        %383 = vmatprep.subr.bf16.mxu0 0
        %384 = vmatpush1.bf16.msra.mxu0 0
        %385 = vmatprep.subr.bf16.mxu0 0
        %386 = vmatpush1.bf16.msra.mxu0 0
        %387 = vmatprep.subr.bf16.mxu0 0
        %388 = vmatpush1.bf16.msra.mxu0 0
        %389 = vmatprep.subr.bf16.mxu0 0
        %390 = vmatpush1.bf16.msra.mxu0 0
        %391 = vmatprep.subr.bf16.mxu0 0
        %392 = vmatpush1.bf16.msra.mxu0 0
        %393 = vmatprep.subr.bf16.mxu0 0
        %394 = vmatpush1.bf16.msra.mxu0 0
        %395 = vmatprep.subr.bf16.mxu0 0
        %396 = vmatpush1.bf16.msra.mxu0 0
        %397 = vmatprep.mubr.bf16.mxu0 0
        %398 = vmatmul.mubr.bf16.gmra.mrb[0].mxu0 %v363
        %v399 = vpop.f32.mrb[0].mxu0
        %v400 = vadd.f32 0.0, %v399
        %v401 = vpop.f32.mrb[0].mxu0
        %v402 = vpop.f32.mrb[0].mxu0
        %v403 = vpop.f32.mrb[0].mxu0
        %404 = vdwg.mxu0
        %v405 = vld [vmem:[%s326] sm:$0xf]
        %v406 = vld [vmem:[%s326 + $0x4] sm:$0xf]
        %v407 = vld [vmem:[%s326 + $0x8] sm:$0xf]
        %v408 = vld [vmem:[%s326 + $0xc] sm:$0xf]
        %v413 = vunpack.c.l.b16 %v405
        %v414 = vunpack.c.l.b16 %v406
        %v415 = vunpack.c.l.b16 %v407
        %v416 = vunpack.c.l.b16 %v408
        %v417 = vpack.c.b16 %v414, %v413
        %v418 = vpack.c.b16 %v416, %v415
        %421 = vmatprep.subr.bf16.mxu0 0
        %422 = vmatpush1.bf16.msra.mxu0 %v417
        %423 = vmatprep.subr.bf16.mxu0 0
        %424 = vmatpush1.bf16.msra.mxu0 %v418
        %425 = vmatprep.subr.bf16.mxu0 0
        %426 = vmatpush1.bf16.msra.mxu0 0
        %427 = vmatprep.subr.bf16.mxu0 0
        %428 = vmatpush1.bf16.msra.mxu0 0
        %429 = vmatprep.subr.bf16.mxu0 0
        %430 = vmatpush1.bf16.msra.mxu0 0
        %431 = vmatprep.subr.bf16.mxu0 0
        %432 = vmatpush1.bf16.msra.mxu0 0
        %433 = vmatprep.subr.bf16.mxu0 0
        %434 = vmatpush1.bf16.msra.mxu0 0
        %435 = vmatprep.subr.bf16.mxu0 0
        %436 = vmatpush1.bf16.msra.mxu0 0
        %437 = vmatprep.subr.bf16.mxu0 0
        %438 = vmatpush1.bf16.msra.mxu0 0
        %439 = vmatprep.subr.bf16.mxu0 0
        %440 = vmatpush1.bf16.msra.mxu0 0
        %441 = vmatprep.subr.bf16.mxu0 0
        %442 = vmatpush1.bf16.msra.mxu0 0
        %443 = vmatprep.subr.bf16.mxu0 0
        %444 = vmatpush1.bf16.msra.mxu0 0
        %445 = vmatprep.subr.bf16.mxu0 0
        %446 = vmatpush1.bf16.msra.mxu0 0
        %447 = vmatprep.subr.bf16.mxu0 0
        %448 = vmatpush1.bf16.msra.mxu0 0
        %449 = vmatprep.subr.bf16.mxu0 0
        %450 = vmatpush1.bf16.msra.mxu0 0
        %451 = vmatprep.subr.bf16.mxu0 0
        %452 = vmatpush1.bf16.msra.mxu0 0
        %453 = vmatprep.mubr.bf16.mxu0 0
        %454 = vmatmul.mubr.bf16.gmra.mrb[0].mxu0 %v363
        %v455 = vpop.f32.mrb[0].mxu0
        %v456 = vadd.f32 0.0, %v455
        %v457 = vpop.f32.mrb[0].mxu0
        %v458 = vpop.f32.mrb[0].mxu0
        %v459 = vpop.f32.mrb[0].mxu0
        %460 = vdwg.mxu0
        %v461 = vld [vmem:[%s331] sm:$0xf]
        %v462 = vld [vmem:[%s331 + $0x4] sm:$0xf]
        %v463 = vld [vmem:[%s331 + $0x8] sm:$0xf]
        %v464 = vld [vmem:[%s331 + $0xc] sm:$0xf]
        %v469 = vunpack.c.l.b16 %v461
        %v470 = vunpack.c.l.b16 %v462
        %v471 = vunpack.c.l.b16 %v463
        %v472 = vunpack.c.l.b16 %v464
        %v473 = vpack.c.b16 %v470, %v469
        %v474 = vpack.c.b16 %v472, %v471
        %477 = vmatprep.subr.bf16.mxu0 0
        %478 = vmatpush1.bf16.msra.mxu0 %v473
        %479 = vmatprep.subr.bf16.mxu0 0
        %480 = vmatpush1.bf16.msra.mxu0 %v474
        %481 = vmatprep.subr.bf16.mxu0 0
        %482 = vmatpush1.bf16.msra.mxu0 0
        %483 = vmatprep.subr.bf16.mxu0 0
        %484 = vmatpush1.bf16.msra.mxu0 0
        %485 = vmatprep.subr.bf16.mxu0 0
        %486 = vmatpush1.bf16.msra.mxu0 0
        %487 = vmatprep.subr.bf16.mxu0 0
        %488 = vmatpush1.bf16.msra.mxu0 0
        %489 = vmatprep.subr.bf16.mxu0 0
        %490 = vmatpush1.bf16.msra.mxu0 0
        %491 = vmatprep.subr.bf16.mxu0 0
        %492 = vmatpush1.bf16.msra.mxu0 0
        %493 = vmatprep.subr.bf16.mxu0 0
        %494 = vmatpush1.bf16.msra.mxu0 0
        %495 = vmatprep.subr.bf16.mxu0 0
        %496 = vmatpush1.bf16.msra.mxu0 0
        %497 = vmatprep.subr.bf16.mxu0 0
        %498 = vmatpush1.bf16.msra.mxu0 0
        %499 = vmatprep.subr.bf16.mxu0 0
        %500 = vmatpush1.bf16.msra.mxu0 0
        %501 = vmatprep.subr.bf16.mxu0 0
        %502 = vmatpush1.bf16.msra.mxu0 0
        %503 = vmatprep.subr.bf16.mxu0 0
        %504 = vmatpush1.bf16.msra.mxu0 0
        %505 = vmatprep.subr.bf16.mxu0 0
        %506 = vmatpush1.bf16.msra.mxu0 0
        %507 = vmatprep.subr.bf16.mxu0 0
        %508 = vmatpush1.bf16.msra.mxu0 0
        %509 = vmatprep.mubr.bf16.mxu0 0
        %510 = vmatmul.mubr.bf16.gmra.mrb[0].mxu0 %v363
        %v511 = vpop.f32.mrb[0].mxu0
        %v512 = vadd.f32 0.0, %v511
        %v513 = vpop.f32.mrb[0].mxu0
        %v514 = vpop.f32.mrb[0].mxu0
        %v515 = vpop.f32.mrb[0].mxu0
        %516 = vdwg.mxu0
        %v517 = vpack.c.bf16 %v400, %v400
        %v518 = vpack.c.bf16 %v456, %v456
        %vm519 = vcmask 64512
        %v521 = vsel %vm519, %v517, 0
        %v524 = vsel %vm519, %v518, 0
        %526 = vmatprep.subr.bf16.mxu0 0
        %527 = vmatpush1.bf16.xpose.msra.mxu0 %v524
        %528 = vmatprep.subr.bf16.mxu0 0
        %529 = vmatpush1.bf16.xpose.msra.mxu0 0
        %530 = vmatprep.subr.bf16.mxu0 0
        %531 = vmatpush1.bf16.xpose.msra.mxu0 0
        %532 = vmatprep.subr.bf16.mxu0 0
        %533 = vmatpush1.bf16.xpose.msra.mxu0 0
        %534 = vmatprep.subr.bf16.mxu0 0
        %535 = vmatpush1.bf16.xpose.msra.mxu0 0
        %536 = vmatprep.subr.bf16.mxu0 0
        %537 = vmatpush1.bf16.xpose.msra.mxu0 0
        %538 = vmatprep.subr.bf16.mxu0 0
        %539 = vmatpush1.bf16.xpose.msra.mxu0 0
        %540 = vmatprep.subr.bf16.mxu0 0
        %541 = vmatpush1.bf16.xpose.msra.mxu0 0
        %542 = vmatprep.subr.bf16.mxu0 0
        %543 = vmatpush1.bf16.xpose.msra.mxu0 0
        %544 = vmatprep.subr.bf16.mxu0 0
        %545 = vmatpush1.bf16.xpose.msra.mxu0 0
        %546 = vmatprep.subr.bf16.mxu0 0
        %547 = vmatpush1.bf16.xpose.msra.mxu0 0
        %548 = vmatprep.subr.bf16.mxu0 0
        %549 = vmatpush1.bf16.xpose.msra.mxu0 0
        %550 = vmatprep.subr.bf16.mxu0 0
        %551 = vmatpush1.bf16.xpose.msra.mxu0 0
        %552 = vmatprep.subr.bf16.mxu0 0
        %553 = vmatpush1.bf16.xpose.msra.mxu0 0
        %554 = vmatprep.subr.bf16.mxu0 0
        %555 = vmatpush1.bf16.xpose.msra.mxu0 0
        %556 = vmatprep.subr.bf16.mxu0 0
        %557 = vmatpush1.bf16.xpose.msra.mxu0 0
        %558 = vmatprep.mubr.bf16.mxu0 0
        %559 = vmatmul.mubr.bf16.gmra.mrb[0].mxu0 %v521
        %v560 = vpop.f32.mrb[0].mxu0
        %v561 = vadd.f32 0.0, %v560
        %v562 = vpop.f32.mrb[0].mxu0
        %v563 = vpop.f32.mrb[0].mxu0
        %v564 = vpop.f32.mrb[0].mxu0
        %565 = vdwg.mxu0
        %v566 = vlaneseq
        %v567 = vshrl.u32 %v566, 7
        %v568 = vlaneseq
        %v569 = vand.u32 %v568, 127
        %vm570 = vcmp.ge.s32.totalorder %v567, %v569
        %v571 = vsel %vm570, %v561, -1e+30
        %v572 = vsel %vm519, %v571, -inf
        %573 = vmax.xlane.f32.xlu0 %v572
        %v574 = vpop.xlane.xlu0 %573
        %v575 = vsub.f32 %v571, %v574
        %v576 = vmul.f32 %v575, 1.442695
        %v577 = vpow.pop %v576
        %v578 = vsel %vm519, %v577, 0.0
        %579 = vadd.xlane.f32.xlu0 %v578
        %v580 = vpop.xlane.xlu0 %579
        %v581 = vpack.c.bf16 %v577, %v577
        %v582 = vpack.c.bf16 %v512, %v512
        %v584 = vsel %vm519, %v581, 0
        %vm586 = vcmask 1043456
        %v588 = vsel %vm586, %v582, 0
        %590 = vmatprep.subr.bf16.mxu0 0
        %591 = vmatpush1.bf16.msra.mxu0 %v588
        %592 = vmatprep.subr.bf16.mxu0 0
        %593 = vmatpush1.bf16.msra.mxu0 0
        %594 = vmatprep.subr.bf16.mxu0 0
        %595 = vmatpush1.bf16.msra.mxu0 0
        %596 = vmatprep.subr.bf16.mxu0 0
        %597 = vmatpush1.bf16.msra.mxu0 0
        %598 = vmatprep.subr.bf16.mxu0 0
        %599 = vmatpush1.bf16.msra.mxu0 0
        %600 = vmatprep.subr.bf16.mxu0 0
        %601 = vmatpush1.bf16.msra.mxu0 0
        %602 = vmatprep.subr.bf16.mxu0 0
        %603 = vmatpush1.bf16.msra.mxu0 0
        %604 = vmatprep.subr.bf16.mxu0 0
        %605 = vmatpush1.bf16.msra.mxu0 0
        %606 = vmatprep.subr.bf16.mxu0 0
        %607 = vmatpush1.bf16.msra.mxu0 0
        %608 = vmatprep.subr.bf16.mxu0 0
        %609 = vmatpush1.bf16.msra.mxu0 0
        %610 = vmatprep.subr.bf16.mxu0 0
        %611 = vmatpush1.bf16.msra.mxu0 0
        %612 = vmatprep.subr.bf16.mxu0 0
        %613 = vmatpush1.bf16.msra.mxu0 0
        %614 = vmatprep.subr.bf16.mxu0 0
        %615 = vmatpush1.bf16.msra.mxu0 0
        %616 = vmatprep.subr.bf16.mxu0 0
        %617 = vmatpush1.bf16.msra.mxu0 0
        %618 = vmatprep.subr.bf16.mxu0 0
        %619 = vmatpush1.bf16.msra.mxu0 0
        %620 = vmatprep.subr.bf16.mxu0 0
        %621 = vmatpush1.bf16.msra.mxu0 0
        %622 = vmatprep.mubr.bf16.mxu0 0
        %623 = vmatmul.mubr.bf16.gmra.mrb[0].mxu0 %v584
        %v624 = vpop.f32.mrb[0].mxu0
        %v625 = vadd.f32 0.0, %v624
        %v626 = vpop.f32.mrb[0].mxu0
        %v627 = vpop.f32.mrb[0].mxu0
        %v628 = vpop.f32.mrb[0].mxu0
        %629 = vdwg.mxu0
        %v630 = vrcp.pop %v580
        %v631 = vmul.f32 %v625, %v630
        %v632 = vld [vmem:[#allocation2] sm:$0xff]
        %v633 = vpack.c.bf16 %v631, %v631
        %v634 = vld [vmem:[%s335] sm:$0xf]
        %v636 = vsel %vm519, %v633, 0
        %v639 = vsel %vm586, %v634, 0
        %641 = vmatprep.subr.bf16.mxu0 0
        %642 = vmatpush1.bf16.msra.mxu0 %v639
        %643 = vmatprep.subr.bf16.mxu0 0
        %644 = vmatpush1.bf16.msra.mxu0 0
        %645 = vmatprep.subr.bf16.mxu0 0
        %646 = vmatpush1.bf16.msra.mxu0 0
        %647 = vmatprep.subr.bf16.mxu0 0
        %648 = vmatpush1.bf16.msra.mxu0 0
        %649 = vmatprep.subr.bf16.mxu0 0
        %650 = vmatpush1.bf16.msra.mxu0 0
        %651 = vmatprep.subr.bf16.mxu0 0
        %652 = vmatpush1.bf16.msra.mxu0 0
        %653 = vmatprep.subr.bf16.mxu0 0
        %654 = vmatpush1.bf16.msra.mxu0 0
        %655 = vmatprep.subr.bf16.mxu0 0
        %656 = vmatpush1.bf16.msra.mxu0 0
        %657 = vmatprep.subr.bf16.mxu0 0
        %658 = vmatpush1.bf16.msra.mxu0 0
        %659 = vmatprep.subr.bf16.mxu0 0
        %660 = vmatpush1.bf16.msra.mxu0 0
        %661 = vmatprep.subr.bf16.mxu0 0
        %662 = vmatpush1.bf16.msra.mxu0 0
        %663 = vmatprep.subr.bf16.mxu0 0
        %664 = vmatpush1.bf16.msra.mxu0 0
        %665 = vmatprep.subr.bf16.mxu0 0
        %666 = vmatpush1.bf16.msra.mxu0 0
        %667 = vmatprep.subr.bf16.mxu0 0
        %668 = vmatpush1.bf16.msra.mxu0 0
        %669 = vmatprep.subr.bf16.mxu0 0
        %670 = vmatpush1.bf16.msra.mxu0 0
        %671 = vmatprep.subr.bf16.mxu0 0
        %672 = vmatpush1.bf16.msra.mxu0 0
        %673 = vmatprep.mubr.bf16.mxu0 0
        %674 = vmatmul.mubr.bf16.gmra.mrb[0].mxu0 %v636
        %v675 = vpop.f32.mrb[0].mxu0
        %v676 = vadd.f32 0.0, %v675
        %v677 = vpop.f32.mrb[0].mxu0
        %v678 = vpop.f32.mrb[0].mxu0
        %v679 = vpop.f32.mrb[0].mxu0
        %680 = vdwg.mxu0
        %v681 = vadd.f32 %v632, %v676
        %682 = vst.msk [vmem:[#allocation2] sm:$0xff] %vm361, %v681
        %p683 = scmp.eq.s32.totalorder %s25, 3
        // Predicated region
        $region49: #{tpu_custom_call.1} parent=43 // pred_check
          %p684 = pneg %p683
        $region50: #{tpu_custom_call.1} parent=43 // pred_check_branch
          %686 = sbr.rel (%p684) target = $region52
        $region51: #{tpu_custom_call.1} parent=43 // pred_region
          %v687 = vld [vmem:[#allocation2] sm:$0xff]
          %v688 = vld [vmem:[%s5] sm:$0x1]
          %v690 = vlaneseq
          %v691 = vshrl.u32 %v690, 7
          %v692 = vsub.s32 0, %v691
          %v693 = vrot.slane %v688, %v692
          %v695 = vadd.f32 %v687, %v693
          %696 = vst.msk [vmem:[%s312] sm:$0xff] %vm361, %v695
        $region52: #{tpu_custom_call.1} parent=43 // pred_fallthru
          _
        %s697 = sand.u32 %s191, 1
        %s698 = scalar_lea.sflag [#allocation4], %s697
        %s699 = sand.u32 %s191, 1
        %s700 = smul.addr %s699, 8
        %s701 = scalar_lea.vmem [#allocation3], %s700
        // Predicated region
        $region53: #{tpu_custom_call.1} parent=43 // pred_check
          %p702 = pneg %p201
        $region54: #{tpu_custom_call.1} parent=43 // pred_check_branch
          %704 = sbr.rel (%p702) target = $region56
        $region55: #{tpu_custom_call.1} parent=43 // pred_region
          %s706 = ssub.s32 128, 128
          %707 = vsyncadd %s698, %s706
          %s708 = smul.addr %s24, 128
          %s709 = scalar_lea.hbm %s6, %s708
          %s711 = sshll.u32 %s701, 4
          %s712 = int_to_ptr.vmem [resolvable:$true] %s711
          %714 = dma.vmem_to_hbm [thread:$0]  %s712, 128, %s709, %s698
        $region56: #{tpu_custom_call.1} parent=43 // pred_fallthru
          _
      $region44: #{tpu_custom_call.1} parent=5 // pred_fallthru
        _
      %p715 = scmp.le.s32.totalorder 2, %s15
      // Predicated region
      $region57: #{tpu_custom_call.1} parent=5 // pred_check
        %p716 = pneg %p715
      $region58: #{tpu_custom_call.1} parent=5 // pred_check_branch
        %718 = sbr.rel (%p716) target = $region60
      $region59: #{tpu_custom_call.1} parent=5 // pred_region
        %s719 = ssub.s32 %s15, 2
        // Predicated region
        $region61: #{tpu_custom_call.1} parent=59 // pred_check
          %p720 = pneg %p207
        $region62: #{tpu_custom_call.1} parent=59 // pred_check_branch
          %722 = sbr.rel (%p720) target = $region64
        $region63: #{tpu_custom_call.1} parent=59 // pred_region
          %s723 = sand.u32 %s192, 1
          %s724 = scalar_lea.sflag [#allocation4], %s723
          %s725 = sand.u32 %s192, 1
          %s726 = smul.addr %s725, 8
          %s727 = scalar_lea.vmem [#allocation3], %s726
          %728 = dma.done %s724, 128
        $region64: #{tpu_custom_call.1} parent=59 // pred_fallthru
          _
      $region60: #{tpu_custom_call.1} parent=5 // pred_fallthru
        _
    $region6: #{tpu_custom_call.1} parent=1 // loop_footer
      %s19 = sadd.s32 1, %s15
    $region7: #{tpu_custom_call.1} parent=1 // loop_footer_branch
      %14 = sbr.rel target = $region3
    $region8: #{tpu_custom_call.1} parent=1 // loop_exit
      _
    %729 = vsyncpa [#allocation4], 1
    %s730 = scalar_lea.sflag [#allocation4], 1
    %731 = vsyncpa %s730, 1

</llo_original>
